<compile_context>
chip_gen: v6e
topology: v6e:2x2x1
jax: 0.10.0
libtpu: 0.0.40
codegen_flags: <defaults>
</compile_context>

<pallas_src>
import functools

import jax
import jax.numpy as jnp
from jax import lax
from jax.experimental import pallas as pl
from jax.experimental.pallas import tpu as pltpu


def _round_up(x, m):
    return (x + m - 1) // m * m


def _convkb_kernel(cw_ref, cb_ref, fb_ref, h_ref, r_ref, t_ref, fw_ref,
                   out_ref, *, out_channels, unroll_threshold=64):
    # h/r/t: (TB, Dp) float32 with the embedding dim on the lane axis
    # (Dp is a multiple of 128, so every vreg is fully packed).
    h = h_ref[...]
    r = r_ref[...]
    t = t_ref[...]

    def channel(c, acc):
        # Conv2d(1, C, (1,3)) weights for channel c, stored flat (3*C,) in SMEM.
        w0 = cw_ref[3 * c]
        w1 = cw_ref[3 * c + 1]
        w2 = cw_ref[3 * c + 2]
        feat = jnp.maximum(w0 * h + w1 * r + w2 * t + cb_ref[c], 0.0)  # ReLU
        # TODO(synk): nn.Dropout is identity at inference time; not modeled.
        # Lane-dense accumulation; cross-lane reduction deferred to the end.
        return acc + feat * fw_ref[pl.ds(c, 1), :]

    acc = jnp.zeros_like(h)
    if out_channels <= unroll_threshold:
        # Static unroll: every SMEM/VMEM index is a compile-time constant.
        for c in range(out_channels):
            acc = channel(c, acc)
    else:
        acc = lax.fori_loop(0, out_channels, channel, acc, unroll=8)

    # One cross-lane reduction per batch tile (instead of per channel) + bias.
    out_ref[...] = jnp.sum(acc, axis=-1, keepdims=True) + fb_ref[0]


def only_convkb_forward(batch_inputs, entity_embed, relation_embed,
                        conv_w, conv_b, fc_w, fc_b):
    """batch_inputs: (B, 3) int32 triples; returns (B, 1) float32 scores."""
    # Glue: embedding lookups (gather) stay in plain JAX.
    head = jnp.take(entity_embed, batch_inputs[:, 0], axis=0).astype(jnp.float32)
    rel = jnp.take(relation_embed, batch_inputs[:, 1], axis=0).astype(jnp.float32)
    tail = jnp.take(entity_embed, batch_inputs[:, 2], axis=0).astype(jnp.float32)

    B, D = head.shape
    C = conv_w.shape[0]

    # Pad D to a lane multiple (128).
    Dp = _round_up(D, 128)
    B8 = _round_up(B, 8)

    # Adaptive batch tile: keep (double-buffered h/r/t tiles + accumulator)
    # under ~12 MiB so the kernel fits the scoped VMEM limit on every chip.
    budget = 12 * 1024 * 1024
    per_row_bytes = Dp * 4 * 7          # 3 inputs * 2 buffers + 1 accumulator
    cap = max(min(budget // per_row_bytes, 1024), 8)
    if B8 <= cap:
        TB = B8                          # whole batch in one tile
    elif cap >= 128:
        TB = (cap // 128) * 128          # tiled: keep tiles lane/sublane aligned
    else:
        TB = (cap // 8) * 8
    Bp = _round_up(B, TB)

    def pad2(x, rows, cols):
        return jnp.pad(x, ((0, rows - x.shape[0]), (0, cols - x.shape[1])))

    head = pad2(head, Bp, Dp)
    rel = pad2(rel, Bp, Dp)
    tail = pad2(tail, Bp, Dp)

    # Conv2d weight (C,1,1,3) -> flat (3*C,) so the SMEM array is 1-D
    # (a (C,3) SMEM array would pad 3 -> 128 columns).
    cw = conv_w.reshape(C, 3).reshape(-1).astype(jnp.float32)
    cb = conv_b.reshape(C).astype(jnp.float32)
    fb = fc_b.reshape(1).astype(jnp.float32)
    # Linear weight (1, C*D) -> (C, D), zero-padded along D so that the
    # ReLU(conv-bias) values living in the padded lanes contribute zero.
    fw = pad2(fc_w.reshape(C, D).astype(jnp.float32), C, Dp)

    smem = pl.BlockSpec(memory_space=pltpu.MemorySpace.SMEM)
    emb_spec = pl.BlockSpec((TB, Dp), lambda i: (i, 0))

    kernel = functools.partial(_convkb_kernel, out_channels=C)

    cost = pl.CostEstimate(
        flops=int(Bp) * int(Dp) * int(C) * 9 + int(Bp) * int(Dp),
        transcendentals=0,
        bytes_accessed=(3 * int(Bp) * int(Dp) + int(C) * int(Dp) + int(Bp)) * 4,
    )

    out = pl.pallas_call(
        kernel,
        out_shape=jax.ShapeDtypeStruct((Bp, 1), jnp.float32),
        grid_spec=pltpu.PrefetchScalarGridSpec(
            num_scalar_prefetch=0,
            grid=(Bp // TB,),
            in_specs=[smem, smem, smem,               # conv w / conv b / fc b
                      emb_spec, emb_spec, emb_spec,   # head, rel, tail tiles
                      pl.BlockSpec((C, Dp), lambda i: (0, 0))],  # fc weight
            out_specs=pl.BlockSpec((TB, 1), lambda i: (i, 0)),
        ),
        compiler_params=pltpu.CompilerParams(
            dimension_semantics=("parallel",),        # batch tiles independent
            vmem_limit_bytes=32 * 1024 * 1024),
        cost_estimate=cost,
    )(cw, cb, fb, head, rel, tail, fw)
    return out[:B]


def ref_forward(batch_inputs, entity_embed, relation_embed,
                conv_w, conv_b, fc_w, fc_b):
    """Pure-JAX reference mirroring the PyTorch forward exactly."""
    head = entity_embed[batch_inputs[:, 0]]
    rel = relation_embed[batch_inputs[:, 1]]
    tail = entity_embed[batch_inputs[:, 2]]
    x = jnp.stack([head, rel, tail], axis=1)             # (B, 3, D)
    x = jnp.transpose(x, (0, 2, 1))                      # (B, D, 3)  (H=D, W=3)
    cw = conv_w.reshape(-1, 3)                           # (C, 3)
    conv = jnp.einsum('bdt,ct->bcd', x, cw) + conv_b[None, :, None]
    conv = jnp.maximum(conv, 0.0)                        # (B, C, D)
    flat = conv.reshape(conv.shape[0], -1)               # (B, C*D)
    return flat @ fc_w.reshape(-1, 1) + fc_b             # (B, 1)


if __name__ == "__main__":
    key = jax.random.PRNGKey(0)
    n_entities, n_relations = 20, 5
    dim, n_heads = 8, 4
    D = dim * n_heads      # 32 = args.dim * args.n_heads
    C = 4                  # args.out_channels
    B = 8                  # batch of triples

    k1, k2, k3, k4, k5, k6 = jax.random.split(key, 6)
    entity_embed = jax.random.normal(k1, (n_entities, D), jnp.float32)
    relation_embed = jax.random.normal(k2, (n_relations, D), jnp.float32)
    conv_w = jax.random.normal(k3, (C, 1, 1, 3), jnp.float32) * 0.5   # Conv2d weight
    conv_b = jax.random.normal(k4, (C,), jnp.float32) * 0.1           # Conv2d bias
    fc_w = jax.random.normal(k5, (1, C * D), jnp.float32) * 0.1       # Linear weight
    fc_b = jax.random.normal(k6, (1,), jnp.float32) * 0.1             # Linear bias

    heads = jax.random.randint(jax.random.PRNGKey(1), (B,), 0, n_entities)
    rels = jax.random.randint(jax.random.PRNGKey(2), (B,), 0, n_relations)
    tails = jax.random.randint(jax.random.PRNGKey(3), (B,), 0, n_entities)
    batch_inputs = jnp.stack([heads, rels, tails], axis=1).astype(jnp.int32)

    out = only_convkb_forward(batch_inputs, entity_embed, relation_embed,
                              conv_w, conv_b, fc_w, fc_b)
    out = jax.block_until_ready(out)

    ref = ref_forward(batch_inputs, entity_embed, relation_embed,
                      conv_w, conv_b, fc_w, fc_b)
    assert out.shape == (B, 1), out.shape
    assert jnp.allclose(out, ref, atol=1e-4, rtol=1e-4), (out, ref)
    print("KERNEL_OK")
</pallas_src>

<mosaic_0001>
module attributes {stable_mosaic.version = 11 : i64} {
  func.func @_convkb_kernel(%arg0: i32, %arg1: memref<12xf32, #tpu.memory_space<smem>>, %arg2: memref<4xf32, #tpu.memory_space<smem>>, %arg3: memref<1xf32, #tpu.memory_space<smem>>, %arg4: memref<8x128xf32, #tpu.memory_space<vmem>>, %arg5: memref<8x128xf32, #tpu.memory_space<vmem>>, %arg6: memref<8x128xf32, #tpu.memory_space<vmem>>, %arg7: memref<4x128xf32, #tpu.memory_space<vmem>>, %arg8: memref<8x1xf32, #tpu.memory_space<vmem>>) attributes {dimension_semantics = [#tpu.dimension_semantics<parallel>], iteration_bounds = array<i64: 1>, scalar_prefetch = 0 : i64, scratch_operands = 0 : i64, tpu.core_type = #tpu.core_type<tc>, window_params = [{transform_indices = @transform_0, window_bounds = array<i64: 12>}, {transform_indices = @transform_1, window_bounds = array<i64: 4>}, {transform_indices = @transform_2, window_bounds = array<i64: 1>}, {transform_indices = @transform_3, window_bounds = array<i64: 8, 128>}, {transform_indices = @transform_4, window_bounds = array<i64: 8, 128>}, {transform_indices = @transform_5, window_bounds = array<i64: 8, 128>}, {pipeline_mode = #tpu.pipeline_mode<synchronous>, transform_indices = @transform_6, window_bounds = array<i64: 4, 128>}, {transform_indices = @transform_7, window_bounds = array<i64: 8, 1>}]} {
    %c0 = arith.constant 0 : index
    %c0_0 = arith.constant 0 : index
    %0 = vector.load %arg4[%c0, %c0_0] : memref<8x128xf32, #tpu.memory_space<vmem>>, vector<8x128xf32>
    %c0_1 = arith.constant 0 : index
    %c0_2 = arith.constant 0 : index
    %1 = vector.load %arg5[%c0_1, %c0_2] : memref<8x128xf32, #tpu.memory_space<vmem>>, vector<8x128xf32>
    %c0_3 = arith.constant 0 : index
    %c0_4 = arith.constant 0 : index
    %2 = vector.load %arg6[%c0_3, %c0_4] : memref<8x128xf32, #tpu.memory_space<vmem>>, vector<8x128xf32>
    %cst = arith.constant 0.000000e+00 : f32
    %3 = vector.broadcast %cst : f32 to vector<8x128xf32>
    %c0_5 = arith.constant 0 : index
    %4 = memref.load %arg1[%c0_5] : memref<12xf32, #tpu.memory_space<smem>>
    %c1 = arith.constant 1 : index
    %5 = memref.load %arg1[%c1] : memref<12xf32, #tpu.memory_space<smem>>
    %c2 = arith.constant 2 : index
    %6 = memref.load %arg1[%c2] : memref<12xf32, #tpu.memory_space<smem>>
    %7 = vector.broadcast %4 : f32 to vector<8x128xf32>
    %8 = arith.mulf %7, %0 : vector<8x128xf32>
    %9 = vector.broadcast %5 : f32 to vector<8x128xf32>
    %10 = arith.mulf %9, %1 : vector<8x128xf32>
    %11 = arith.addf %8, %10 : vector<8x128xf32>
    %12 = vector.broadcast %6 : f32 to vector<8x128xf32>
    %13 = arith.mulf %12, %2 : vector<8x128xf32>
    %14 = arith.addf %11, %13 : vector<8x128xf32>
    %c0_6 = arith.constant 0 : index
    %15 = memref.load %arg2[%c0_6] : memref<4xf32, #tpu.memory_space<smem>>
    %16 = vector.broadcast %15 : f32 to vector<8x128xf32>
    %17 = arith.addf %14, %16 : vector<8x128xf32>
    %cst_7 = arith.constant 0.000000e+00 : f32
    %18 = vector.broadcast %cst_7 : f32 to vector<8x128xf32>
    %19 = arith.maximumf %17, %18 : vector<8x128xf32>
    %c0_8 = arith.constant 0 : index
    %c0_9 = arith.constant 0 : index
    %20 = vector.load %arg7[%c0_8, %c0_9] : memref<4x128xf32, #tpu.memory_space<vmem>>, vector<1x128xf32>
    %21 = vector.broadcast %20 : vector<1x128xf32> to vector<8x128xf32>
    %22 = arith.mulf %19, %21 : vector<8x128xf32>
    %23 = arith.addf %3, %22 : vector<8x128xf32>
    %c3 = arith.constant 3 : index
    %24 = memref.load %arg1[%c3] : memref<12xf32, #tpu.memory_space<smem>>
    %c4 = arith.constant 4 : index
    %25 = memref.load %arg1[%c4] : memref<12xf32, #tpu.memory_space<smem>>
    %c5 = arith.constant 5 : index
    %26 = memref.load %arg1[%c5] : memref<12xf32, #tpu.memory_space<smem>>
    %27 = vector.broadcast %24 : f32 to vector<8x128xf32>
    %28 = arith.mulf %27, %0 : vector<8x128xf32>
    %29 = vector.broadcast %25 : f32 to vector<8x128xf32>
    %30 = arith.mulf %29, %1 : vector<8x128xf32>
    %31 = arith.addf %28, %30 : vector<8x128xf32>
    %32 = vector.broadcast %26 : f32 to vector<8x128xf32>
    %33 = arith.mulf %32, %2 : vector<8x128xf32>
    %34 = arith.addf %31, %33 : vector<8x128xf32>
    %c1_10 = arith.constant 1 : index
    %35 = memref.load %arg2[%c1_10] : memref<4xf32, #tpu.memory_space<smem>>
    %36 = vector.broadcast %35 : f32 to vector<8x128xf32>
    %37 = arith.addf %34, %36 : vector<8x128xf32>
    %cst_11 = arith.constant 0.000000e+00 : f32
    %38 = vector.broadcast %cst_11 : f32 to vector<8x128xf32>
    %39 = arith.maximumf %37, %38 : vector<8x128xf32>
    %c1_12 = arith.constant 1 : index
    %c0_13 = arith.constant 0 : index
    %40 = vector.load %arg7[%c1_12, %c0_13] : memref<4x128xf32, #tpu.memory_space<vmem>>, vector<1x128xf32>
    %41 = vector.broadcast %40 : vector<1x128xf32> to vector<8x128xf32>
    %42 = arith.mulf %39, %41 : vector<8x128xf32>
    %43 = arith.addf %23, %42 : vector<8x128xf32>
    %c6 = arith.constant 6 : index
    %44 = memref.load %arg1[%c6] : memref<12xf32, #tpu.memory_space<smem>>
    %c7 = arith.constant 7 : index
    %45 = memref.load %arg1[%c7] : memref<12xf32, #tpu.memory_space<smem>>
    %c8 = arith.constant 8 : index
    %46 = memref.load %arg1[%c8] : memref<12xf32, #tpu.memory_space<smem>>
    %47 = vector.broadcast %44 : f32 to vector<8x128xf32>
    %48 = arith.mulf %47, %0 : vector<8x128xf32>
    %49 = vector.broadcast %45 : f32 to vector<8x128xf32>
    %50 = arith.mulf %49, %1 : vector<8x128xf32>
    %51 = arith.addf %48, %50 : vector<8x128xf32>
    %52 = vector.broadcast %46 : f32 to vector<8x128xf32>
    %53 = arith.mulf %52, %2 : vector<8x128xf32>
    %54 = arith.addf %51, %53 : vector<8x128xf32>
    %c2_14 = arith.constant 2 : index
    %55 = memref.load %arg2[%c2_14] : memref<4xf32, #tpu.memory_space<smem>>
    %56 = vector.broadcast %55 : f32 to vector<8x128xf32>
    %57 = arith.addf %54, %56 : vector<8x128xf32>
    %cst_15 = arith.constant 0.000000e+00 : f32
    %58 = vector.broadcast %cst_15 : f32 to vector<8x128xf32>
    %59 = arith.maximumf %57, %58 : vector<8x128xf32>
    %c2_16 = arith.constant 2 : index
    %c0_17 = arith.constant 0 : index
    %60 = vector.load %arg7[%c2_16, %c0_17] : memref<4x128xf32, #tpu.memory_space<vmem>>, vector<1x128xf32>
    %61 = vector.broadcast %60 : vector<1x128xf32> to vector<8x128xf32>
    %62 = arith.mulf %59, %61 : vector<8x128xf32>
    %63 = arith.addf %43, %62 : vector<8x128xf32>
    %c9 = arith.constant 9 : index
    %64 = memref.load %arg1[%c9] : memref<12xf32, #tpu.memory_space<smem>>
    %c10 = arith.constant 10 : index
    %65 = memref.load %arg1[%c10] : memref<12xf32, #tpu.memory_space<smem>>
    %c11 = arith.constant 11 : index
    %66 = memref.load %arg1[%c11] : memref<12xf32, #tpu.memory_space<smem>>
    %67 = vector.broadcast %64 : f32 to vector<8x128xf32>
    %68 = arith.mulf %67, %0 : vector<8x128xf32>
    %69 = vector.broadcast %65 : f32 to vector<8x128xf32>
    %70 = arith.mulf %69, %1 : vector<8x128xf32>
    %71 = arith.addf %68, %70 : vector<8x128xf32>
    %72 = vector.broadcast %66 : f32 to vector<8x128xf32>
    %73 = arith.mulf %72, %2 : vector<8x128xf32>
    %74 = arith.addf %71, %73 : vector<8x128xf32>
    %c3_18 = arith.constant 3 : index
    %75 = memref.load %arg2[%c3_18] : memref<4xf32, #tpu.memory_space<smem>>
    %76 = vector.broadcast %75 : f32 to vector<8x128xf32>
    %77 = arith.addf %74, %76 : vector<8x128xf32>
    %cst_19 = arith.constant 0.000000e+00 : f32
    %78 = vector.broadcast %cst_19 : f32 to vector<8x128xf32>
    %79 = arith.maximumf %77, %78 : vector<8x128xf32>
    %c3_20 = arith.constant 3 : index
    %c0_21 = arith.constant 0 : index
    %80 = vector.load %arg7[%c3_20, %c0_21] : memref<4x128xf32, #tpu.memory_space<vmem>>, vector<1x128xf32>
    %81 = vector.broadcast %80 : vector<1x128xf32> to vector<8x128xf32>
    %82 = arith.mulf %79, %81 : vector<8x128xf32>
    %83 = arith.addf %63, %82 : vector<8x128xf32>
    %cst_22 = arith.constant dense<0.000000e+00> : vector<8xf32>
    %84 = vector.multi_reduction <add>, %83, %cst_22 [1] : vector<8x128xf32> to vector<8xf32>
    %85 = vector.shape_cast %84 : vector<8xf32> to vector<8x1xf32>
    %c0_23 = arith.constant 0 : index
    %86 = memref.load %arg3[%c0_23] : memref<1xf32, #tpu.memory_space<smem>>
    %87 = vector.broadcast %86 : f32 to vector<8x1xf32>
    %88 = arith.addf %85, %87 : vector<8x1xf32>
    %c0_24 = arith.constant 0 : index
    %c0_25 = arith.constant 0 : index
    %89 = vector.load %arg8[%c0_24, %c0_25] : memref<8x1xf32, #tpu.memory_space<vmem>>, vector<8x1xf32>
    tpu.vector_store %arg8[%c0_24, %c0_25], %88 {strides = array<i32>} : memref<8x1xf32, #tpu.memory_space<vmem>>, vector<8x1xf32>,
    return
  }
  func.func @transform_0(%arg0: i32) -> i32 {
    %c0_i32 = arith.constant 0 : i32
    %c0_i32_0 = arith.constant 0 : i32
    return %c0_i32 : i32
  }
  func.func @transform_1(%arg0: i32) -> i32 {
    %c0_i32 = arith.constant 0 : i32
    %c0_i32_0 = arith.constant 0 : i32
    return %c0_i32 : i32
  }
  func.func @transform_2(%arg0: i32) -> i32 {
    %c0_i32 = arith.constant 0 : i32
    %c0_i32_0 = arith.constant 0 : i32
    return %c0_i32 : i32
  }
  func.func @transform_3(%arg0: i32) -> (i32, i32) {
    %c0_i32 = arith.constant 0 : i32
    %c0_i32_0 = arith.constant 0 : i32
    return %arg0, %c0_i32 : i32, i32
  }
  func.func @transform_4(%arg0: i32) -> (i32, i32) {
    %c0_i32 = arith.constant 0 : i32
    %c0_i32_0 = arith.constant 0 : i32
    return %arg0, %c0_i32 : i32, i32
  }
  func.func @transform_5(%arg0: i32) -> (i32, i32) {
    %c0_i32 = arith.constant 0 : i32
    %c0_i32_0 = arith.constant 0 : i32
    return %arg0, %c0_i32 : i32, i32
  }
  func.func @transform_6(%arg0: i32) -> (i32, i32) {
    %c0_i32 = arith.constant 0 : i32
    %c0_i32_0 = arith.constant 0 : i32
    %c0_i32_1 = arith.constant 0 : i32
    return %c0_i32, %c0_i32_0 : i32, i32
  }
  func.func @transform_7(%arg0: i32) -> (i32, i32) {
    %c0_i32 = arith.constant 0 : i32
    %c0_i32_0 = arith.constant 0 : i32
    return %arg0, %c0_i32 : i32, i32
  }
}

</mosaic_0001>

<llo_original>
// kernel: tpu_custom_call.1
$region0: #{tpu_custom_call.1}
  #allocation0 [shape = 'u32[]', space=smem, size = 0x4, offset = 0x4, fixed_abs, tag = 'smem constant byte address 0x4 - core index']
  #allocation1 [shape = 'u32[144,128]{1,0:T(1,128)}', space=vmem, size = 0x12000, scoped, tag = 'internal scratch']
  #allocation2 [shape = 'f32[1]{0:T(128)S(6)}', space=smem, size = 0x200, scoped, tag = 'scoped memory for tpu_custom_call.1']
  %s0 = inlined_call_operand.vmem [shape: f32[12], index: 0, kind: input, shape index: {}]
  %s1 = inlined_call_operand.hbm [shape: f32[4], index: 1, kind: input, shape index: {}]
  %s2 = inlined_call_operand.<no memory space> [shape: f32[1], index: 2, kind: input, shape index: {}]
  %s3 = inlined_call_operand.hbm [shape: f32[8,128], index: 3, kind: input, shape index: {}]
  %s4 = inlined_call_operand.hbm [shape: f32[8,128], index: 4, kind: input, shape index: {}]
  %s5 = inlined_call_operand.vmem [shape: f32[8,128], index: 5, kind: input, shape index: {}]
  %s6 = inlined_call_operand.hbm [shape: f32[4,128], index: 6, kind: input, shape index: {}]
  %s7 = inlined_call_operand.vmem [shape: f32[8,1], index: 7, kind: output, shape index: {}]
  %s8 = sld [smem:[#allocation0]]
  $region58: #{tpu_custom_call.1} parent=0
    _
  %s10 = ssub.s32 1, %s8
  %s11 = scalar_select 0, %s10, %s8
  %12 = sst [smem:[#allocation2]] %s2
  $region1: #{tpu_custom_call.1} parent=0
    #allocation3 [shape = 'u8[512]{0}', space=smem, size = 0x200, scoped, tag = 'input window, operand 0, single buffered']
    #allocation4 [shape = 's32[1]{0}', space=sflag, size = 0x4, scoped, tag = 'scoped memory for tpu_custom_call.1']
    #allocation5 [shape = 's32[1]{0}', space=sflag, size = 0x4, scoped, tag = 'scoped memory for tpu_custom_call.1']
    #allocation6 [shape = 's32[1]{0}', space=sflag, size = 0x4, scoped, tag = 'scoped memory for tpu_custom_call.1']
    #allocation7 [shape = 'u8[512]{0}', space=smem, size = 0x200, scoped, tag = 'input window, operand 1, single buffered']
    #allocation8 [shape = 'u8[4096]{0}', space=vmem, size = 0x1000, scoped, tag = 'input window, operand 3, single buffered']
    #allocation9 [shape = 'u8[4096]{0}', space=vmem, size = 0x1000, scoped, tag = 'input window, operand 4, single buffered']
    #allocation10 [shape = 's32[1]{0}', space=sflag, size = 0x4, scoped, tag = 'scoped memory for tpu_custom_call.1']
    #allocation11 [shape = 'u8[2048]{0}', space=vmem, size = 0x800, scoped, tag = 'input window, operand 6, single buffered']
    %13 = vsyncpa [#allocation6], 0
    %14 = vsyncpa [#allocation5], 0
    %15 = vsyncpa [#allocation4], 0
    %16 = vsyncpa [#allocation10], 0
    // Predicated region
    $region2: #{tpu_custom_call.1} parent=1 // pred_check
      _
    $region3: #{tpu_custom_call.1} parent=1 // pred_check_branch
      %18 = sbr.rel (0) target = $region5
    $region4: #{tpu_custom_call.1} parent=1 // pred_region
      %s20 = ssub.s32 16, 16
      %21 = vsyncadd [#allocation6], %s20
      %s23 = sshll.u32 %s0, 4
      %s24 = int_to_ptr.vmem [resolvable:$true] %s23
      %26 = dma.vmem_to_smem %s24, 16, [#allocation3], [#allocation6]
    $region5: #{tpu_custom_call.1} parent=1 // pred_fallthru
      _
    // Predicated region
    $region6: #{tpu_custom_call.1} parent=1 // pred_check
      _
    $region7: #{tpu_custom_call.1} parent=1 // pred_check_branch
      %28 = sbr.rel (0) target = $region9
    $region8: #{tpu_custom_call.1} parent=1 // pred_region
      %s30 = ssub.s32 16, 16
      %31 = vsyncadd [#allocation5], %s30
      %34 = dma.hbm_to_smem %s1, 16, [#allocation7], [#allocation5]
    $region9: #{tpu_custom_call.1} parent=1 // pred_fallthru
      _
    // Predicated region
    $region10: #{tpu_custom_call.1} parent=1 // pred_check
      _
    $region11: #{tpu_custom_call.1} parent=1 // pred_check_branch
      %36 = sbr.rel (0) target = $region13
    $region12: #{tpu_custom_call.1} parent=1 // pred_region
      _
    $region13: #{tpu_custom_call.1} parent=1 // pred_fallthru
      _
    // Predicated region
    $region14: #{tpu_custom_call.1} parent=1 // pred_check
      _
    $region15: #{tpu_custom_call.1} parent=1 // pred_check_branch
      %38 = sbr.rel (0) target = $region17
    $region16: #{tpu_custom_call.1} parent=1 // pred_region
      %s40 = ssub.s32 128, 128
      %41 = vsyncadd [#allocation4], %s40
      %s43 = sshll.u32 [#allocation8], 4
      %s44 = int_to_ptr.vmem [resolvable:$true] %s43
      %46 = dma.hbm_to_vmem [thread:$0]  %s3, 128, %s44, [#allocation4]
    $region17: #{tpu_custom_call.1} parent=1 // pred_fallthru
      _
    // Predicated region
    $region18: #{tpu_custom_call.1} parent=1 // pred_check
      _
    $region19: #{tpu_custom_call.1} parent=1 // pred_check_branch
      %48 = sbr.rel (0) target = $region21
    $region20: #{tpu_custom_call.1} parent=1 // pred_region
      %s50 = ssub.s32 128, 128
      %51 = vsyncadd [#allocation10], %s50
      %s53 = sshll.u32 [#allocation9], 4
      %s54 = int_to_ptr.vmem [resolvable:$true] %s53
      %56 = dma.hbm_to_vmem [thread:$0]  %s4, 128, %s54, [#allocation10]
    $region21: #{tpu_custom_call.1} parent=1 // pred_fallthru
      _
    // Predicated region
    $region22: #{tpu_custom_call.1} parent=1 // pred_check
      _
    $region23: #{tpu_custom_call.1} parent=1 // pred_check_branch
      %58 = sbr.rel (0) target = $region25
    $region24: #{tpu_custom_call.1} parent=1 // pred_region
      _
    $region25: #{tpu_custom_call.1} parent=1 // pred_fallthru
      _
    // Predicated region
    $region26: #{tpu_custom_call.1} parent=1 // pred_check
      _
    $region27: #{tpu_custom_call.1} parent=1 // pred_check_branch
      %60 = sbr.rel (0) target = $region29
    $region28: #{tpu_custom_call.1} parent=1 // pred_region
      %s62 = ssub.s32 64, 64
      %63 = vsyncadd [#allocation10], %s62
      %s65 = sshll.u32 [#allocation11], 4
      %s66 = int_to_ptr.vmem [resolvable:$true] %s65
      %68 = dma.hbm_to_vmem [thread:$0]  %s6, 64, %s66, [#allocation10]
    $region29: #{tpu_custom_call.1} parent=1 // pred_fallthru
      _
    // Predicated region
    $region30: #{tpu_custom_call.1} parent=1 // pred_check
      _
    $region31: #{tpu_custom_call.1} parent=1 // pred_check_branch
      %70 = sbr.rel (0) target = $region33
    $region32: #{tpu_custom_call.1} parent=1 // pred_region
      %71 = dma.done [#allocation6], 16
    $region33: #{tpu_custom_call.1} parent=1 // pred_fallthru
      _
    // Predicated region
    $region34: #{tpu_custom_call.1} parent=1 // pred_check
      _
    $region35: #{tpu_custom_call.1} parent=1 // pred_check_branch
      %73 = sbr.rel (0) target = $region37
    $region36: #{tpu_custom_call.1} parent=1 // pred_region
      %74 = dma.done [#allocation5], 16
    $region37: #{tpu_custom_call.1} parent=1 // pred_fallthru
      _
    // Predicated region
    $region38: #{tpu_custom_call.1} parent=1 // pred_check
      _
    $region39: #{tpu_custom_call.1} parent=1 // pred_check_branch
      %76 = sbr.rel (0) target = $region41
    $region40: #{tpu_custom_call.1} parent=1 // pred_region
      %77 = dma.done [#allocation4], 128
    $region41: #{tpu_custom_call.1} parent=1 // pred_fallthru
      _
    // Predicated region
    $region42: #{tpu_custom_call.1} parent=1 // pred_check
      _
    $region43: #{tpu_custom_call.1} parent=1 // pred_check_branch
      %79 = sbr.rel (0) target = $region45
    $region44: #{tpu_custom_call.1} parent=1 // pred_region
      %80 = dma.done [#allocation10], 128
    $region45: #{tpu_custom_call.1} parent=1 // pred_fallthru
      _
    // Predicated region
    $region46: #{tpu_custom_call.1} parent=1 // pred_check
      _
    $region47: #{tpu_custom_call.1} parent=1 // pred_check_branch
      %82 = sbr.rel (0) target = $region49
    $region48: #{tpu_custom_call.1} parent=1 // pred_region
      %83 = dma.done [#allocation10], 64
    $region49: #{tpu_custom_call.1} parent=1 // pred_fallthru
      _
    %84 = sfence
    %v85 = vld [vmem:[#allocation8] sm:$0xff]
    %v86 = vld [vmem:[#allocation9] sm:$0xff]
    %v87 = vld [vmem:[%s5] sm:$0xff]
    %s88 = sld [smem:[#allocation3]]
    %s89 = sld [smem:[#allocation3 + $0x1]]
    %s90 = sld [smem:[#allocation3 + $0x2]]
    %v91 = vstv %s88
    %v92 = vmul.f32 %v91, %v85
    %v93 = vstv %s89
    %v94 = vmul.f32 %v93, %v86
    %v95 = vadd.f32 %v92, %v94
    %v96 = vstv %s90
    %v97 = vmul.f32 %v96, %v87
    %v98 = vadd.f32 %v95, %v97
    %s99 = sld [smem:[#allocation7]]
    %v100 = vstv %s99
    %v101 = vadd.f32 %v98, %v100
    %v102 = vmax.f32 %v101, 0.0
    %v103 = vld [vmem:[#allocation11] sm:$0x1]
    %v104 = vlaneseq
    %v105 = vshrl.u32 %v104, 7
    %v106 = vsub.s32 0, %v105
    %v107 = vrot.slane %v103, %v106
    %v108 = vmul.f32 %v102, %v107
    %v109 = vadd.f32 %v108, 0.0
    %s110 = sld [smem:[#allocation3 + $0x3]]
    %s111 = sld [smem:[#allocation3 + $0x4]]
    %s112 = sld [smem:[#allocation3 + $0x5]]
    %v113 = vstv %s110
    %v114 = vmul.f32 %v113, %v85
    %v115 = vstv %s111
    %v116 = vmul.f32 %v115, %v86
    %v117 = vadd.f32 %v114, %v116
    %v118 = vstv %s112
    %v119 = vmul.f32 %v118, %v87
    %v120 = vadd.f32 %v117, %v119
    %s121 = sld [smem:[#allocation7 + $0x1]]
    %v122 = vstv %s121
    %v123 = vadd.f32 %v120, %v122
    %v124 = vmax.f32 %v123, 0.0
    %v125 = vld [vmem:[#allocation11 + $0x1] sm:$0x1]
    %v126 = vlaneseq
    %v127 = vshrl.u32 %v126, 7
    %v128 = vsub.s32 0, %v127
    %v129 = vrot.slane %v125, %v128
    %v130 = vmul.f32 %v124, %v129
    %v131 = vadd.f32 %v109, %v130
    %s132 = sld [smem:[#allocation3 + $0x6]]
    %s133 = sld [smem:[#allocation3 + $0x7]]
    %s134 = sld [smem:[#allocation3 + $0x8]]
    %v135 = vstv %s132
    %v136 = vmul.f32 %v135, %v85
    %v137 = vstv %s133
    %v138 = vmul.f32 %v137, %v86
    %v139 = vadd.f32 %v136, %v138
    %v140 = vstv %s134
    %v141 = vmul.f32 %v140, %v87
    %v142 = vadd.f32 %v139, %v141
    %s143 = sld [smem:[#allocation7 + $0x2]]
    %v144 = vstv %s143
    %v145 = vadd.f32 %v142, %v144
    %v146 = vmax.f32 %v145, 0.0
    %v147 = vld [vmem:[#allocation11 + $0x2] sm:$0x1]
    %v148 = vlaneseq
    %v149 = vshrl.u32 %v148, 7
    %v150 = vsub.s32 0, %v149
    %v151 = vrot.slane %v147, %v150
    %v152 = vmul.f32 %v146, %v151
    %v153 = vadd.f32 %v131, %v152
    %s154 = sld [smem:[#allocation3 + $0x9]]
    %s155 = sld [smem:[#allocation3 + $0xa]]
    %s156 = sld [smem:[#allocation3 + $0xb]]
    %v157 = vstv %s154
    %v158 = vmul.f32 %v157, %v85
    %v159 = vstv %s155
    %v160 = vmul.f32 %v159, %v86
    %v161 = vadd.f32 %v158, %v160
    %v162 = vstv %s156
    %v163 = vmul.f32 %v162, %v87
    %v164 = vadd.f32 %v161, %v163
    %s165 = sld [smem:[#allocation7 + $0x3]]
    %v166 = vstv %s165
    %v167 = vadd.f32 %v164, %v166
    %v168 = vmax.f32 %v167, 0.0
    %v169 = vld [vmem:[#allocation11 + $0x3] sm:$0x1]
    %v170 = vlaneseq
    %v171 = vshrl.u32 %v170, 7
    %v172 = vsub.s32 0, %v171
    %v173 = vrot.slane %v169, %v172
    %v174 = vmul.f32 %v168, %v173
    %v175 = vadd.f32 %v153, %v174
    %176 = vadd.xlane.f32.xlu0 %v175
    %v177 = vpop.xlane.xlu0 %176
    %s178 = sld [smem:[#allocation2]]
    %v179 = vstv %s178
    %v180 = vadd.f32 %v177, %v179
    %vm181 = vcmask 7168
    %182 = vst.msk [vmem:[%s7] sm:$0xff] %vm181, %v180
    // Predicated region
    $region50: #{tpu_custom_call.1} parent=1 // pred_check
      _
    $region51: #{tpu_custom_call.1} parent=1 // pred_check_branch
      %184 = sbr.rel (0) target = $region53
    $region52: #{tpu_custom_call.1} parent=1 // pred_region
      _
    $region53: #{tpu_custom_call.1} parent=1 // pred_fallthru
      _
    // Predicated region
    $region54: #{tpu_custom_call.1} parent=1 // pred_check
      _
    $region55: #{tpu_custom_call.1} parent=1 // pred_check_branch
      %186 = sbr.rel (0) target = $region57
    $region56: #{tpu_custom_call.1} parent=1 // pred_region
      _
    $region57: #{tpu_custom_call.1} parent=1 // pred_fallthru
      _
    %187 = vsyncpa [#allocation4], 1
    %188 = vsyncpa [#allocation10], 1
    %189 = vsyncpa [#allocation5], 1
    %190 = vsyncpa [#allocation6], 1

</llo_original>
